<compile_context>
chip_gen: v7x
topology: tpu7x:2x2x1
jax: 0.10.0
libtpu: 0.0.40
codegen_flags: <defaults>
</compile_context>

<pallas_src>
import functools

import jax
import jax.numpy as jnp
from jax.experimental import pallas as pl
from jax.experimental.pallas import tpu as pltpu

COMPUTE_DTYPE = jnp.bfloat16  # MXU input dtype on all generations


def _round_up(x, m):
    return ((x + m - 1) // m) * m


# ---------------------------------------------------------------------------
# Fused hidden stack: for each layer  x <- ReLU(x @ W_l + b_l)
# One grid step processes a (tm, F_pad) row tile through ALL hidden layers.
# ---------------------------------------------------------------------------
def _hidden_stack_kernel(*refs, num_layers):
    x_ref = refs[0]
    o_ref = refs[-1]
    acc = x_ref[...]  # bf16 (tm, F_pad)
    for l in range(num_layers):
        w_ref = refs[1 + 2 * l]
        b_ref = refs[2 + 2 * l]
        # MXU matmul, f32 accumulation.
        h = jnp.dot(acc, w_ref[...], preferred_element_type=jnp.float32)
        # Bias + ReLU in f32 (VPU epilogue hides under the MXU slot).
        h = jnp.maximum(h + b_ref[...], 0.0)
        # Back to bf16 for the next MXU pass / the HBM writeback.
        acc = h.astype(o_ref.dtype)
    o_ref[...] = acc


def hidden_stack(x, weights, biases, *, tm):
    """x: (M_pad, F_pad) bf16.  weights[l]: (d_l, d_{l+1}) bf16.  biases[l]: (1, d_{l+1}) f32."""
    M, F = x.shape
    h_out = weights[-1].shape[1]
    num_layers = len(weights)

    in_specs = [pl.BlockSpec((tm, F), lambda i: (i, 0))]
    operands = [x]
    for w, b in zip(weights, biases):
        kin, kout = w.shape
        in_specs.append(pl.BlockSpec((kin, kout), lambda i: (0, 0)))  # tiny, VMEM-resident
        in_specs.append(pl.BlockSpec((1, kout), lambda i: (0, 0)))
        operands.extend([w, b])

    kernel = functools.partial(_hidden_stack_kernel, num_layers=num_layers)
    return pl.pallas_call(
        kernel,
        out_shape=jax.ShapeDtypeStruct((M, h_out), x.dtype),
        grid=(M // tm,),
        in_specs=in_specs,
        out_specs=pl.BlockSpec((tm, h_out), lambda i: (i, 0)),
        compiler_params=pltpu.CompilerParams(dimension_semantics=("parallel",)),
    )(*operands)


# ---------------------------------------------------------------------------
# Output layer: (B_pad, K) @ (K, label_pad) + b, K tiled with f32 accumulator.
# ---------------------------------------------------------------------------
def _out_linear_kernel(x_ref, w_ref, b_ref, o_ref, acc_ref):
    k = pl.program_id(1)

    @pl.when(k == 0)
    def _():
        acc_ref[...] = jnp.zeros_like(acc_ref)

    acc_ref[...] += jnp.dot(x_ref[...], w_ref[...], preferred_element_type=jnp.float32)

    @pl.when(k == pl.num_programs(1) - 1)
    def _():
        o_ref[...] = (acc_ref[...] + b_ref[...]).astype(o_ref.dtype)


def out_linear(x, w, b, *, tm, tk):
    """x: (M, K) bf16, w: (K, N) bf16, b: (1, N) f32 -> (M, N) f32."""
    M, K = x.shape
    _, N = w.shape
    return pl.pallas_call(
        _out_linear_kernel,
        out_shape=jax.ShapeDtypeStruct((M, N), jnp.float32),
        grid=(M // tm, K // tk),
        in_specs=[
            pl.BlockSpec((tm, tk), lambda i, k: (i, k)),
            pl.BlockSpec((tk, N), lambda i, k: (k, 0)),
            pl.BlockSpec((1, N), lambda i, k: (0, 0)),
        ],
        out_specs=pl.BlockSpec((tm, N), lambda i, k: (i, 0)),
        scratch_shapes=[pltpu.VMEM((tm, N), jnp.float32)],
        compiler_params=pltpu.CompilerParams(
            dimension_semantics=("parallel", "arbitrary")),
    )(x, w, b)


# ---------------------------------------------------------------------------
# Parameters
# ---------------------------------------------------------------------------
def init_ffnn_params(key, feats, hidden, label, nb_nodes, dtype=jnp.float32):
    """Deterministic init matching nn.Linear shapes (uniform +/- 1/sqrt(fan_in))."""
    if isinstance(hidden, int):
        hidden = [hidden]
    dims = [feats] + list(hidden)
    params = {"hidden": [], "out": None}
    for in_dim, out_dim in zip(dims[:-1], dims[1:]):
        key, kw, kb = jax.random.split(key, 3)
        bound = 1.0 / jnp.sqrt(in_dim)
        w = jax.random.uniform(kw, (in_dim, out_dim), dtype, -bound, bound)
        b = jax.random.uniform(kb, (out_dim,), dtype, -bound, bound)
        params["hidden"].append((w, b))
    in_dim = nb_nodes * hidden[-1]
    key, kw, kb = jax.random.split(key, 3)
    bound = 1.0 / jnp.sqrt(in_dim)
    w = jax.random.uniform(kw, (in_dim, label), dtype, -bound, bound)
    b = jax.random.uniform(kb, (label,), dtype, -bound, bound)
    params["out"] = (w, b)
    return params


def pack_ffnn_params(params, nb_nodes, compute_dtype=COMPUTE_DTYPE):
    """Pad all widths up to multiples of 128 (lane-dense) and cast matmul operands to bf16.

    Zero-padding is exact: padded weight columns/rows and bias entries are zero, so
    padded lanes carry exact zeros through ReLU and contribute nothing downstream.
    """
    packed = {"hidden_w": [], "hidden_b": []}
    for (w, b) in params["hidden"]:
        in_dim, out_dim = w.shape
        in_pad = _round_up(in_dim, 128)
        out_pad = _round_up(out_dim, 128)
        wp = jnp.zeros((in_pad, out_pad), compute_dtype)
        wp = wp.at[:in_dim, :out_dim].set(w.astype(compute_dtype))
        bp = jnp.zeros((1, out_pad), jnp.float32)
        bp = bp.at[0, :out_dim].set(b.astype(jnp.float32))
        packed["hidden_w"].append(wp)
        packed["hidden_b"].append(bp)

    w_out, b_out = params["out"]
    k_in, label = w_out.shape
    h_last = k_in // nb_nodes
    h_pad = _round_up(h_last, 128)
    label_pad = _round_up(label, 128)
    # Remap output-weight rows to the padded per-node hidden layout.
    w3 = w_out.reshape(nb_nodes, h_last, label)
    wop = jnp.zeros((nb_nodes, h_pad, label_pad), compute_dtype)
    wop = wop.at[:, :h_last, :label].set(w3.astype(compute_dtype))
    packed["out_w"] = wop.reshape(nb_nodes * h_pad, label_pad)
    packed["out_b"] = jnp.zeros((1, label_pad), jnp.float32).at[0, :label].set(
        b_out.astype(jnp.float32))
    packed["label"] = label
    packed["feats"] = params["hidden"][0][0].shape[0]
    return packed


# ---------------------------------------------------------------------------
# Forward pass
# ---------------------------------------------------------------------------
def ffnn_forward(packed, inputs):
    """Forward pass of FFNN. inputs = (v, adj); adj is unused."""
    v, _adj = inputs
    B, N, F = v.shape
    compute_dtype = packed["hidden_w"][0].dtype
    feats_pad = packed["hidden_w"][0].shape[0]
    h_pad = packed["hidden_w"][-1].shape[1]
    label = packed["label"]

    # ---- fused hidden stack over M = B*N rows -----------------------------
    M = B * N
    tm = 256 if M >= 256 else _round_up(M, 16)
    M_pad = _round_up(M, tm)
    x = v.reshape(M, F).astype(compute_dtype)
    x = jnp.zeros((M_pad, feats_pad), compute_dtype).at[:M, :F].set(x)

    h = hidden_stack(x, packed["hidden_w"], packed["hidden_b"], tm=tm)  # (M_pad, h_pad) bf16

    # ---- Flatten + output Linear ------------------------------------------
    # Padded hidden lanes are exact zeros, and padded out-weight rows are zero,
    # so the flattened padded layout is equivalent to nn.Flatten on the real dims.
    h = h[:M].reshape(B, N * h_pad)
    K_out = N * h_pad
    tm_o = 256 if B >= 256 else _round_up(B, 16)
    B_pad = _round_up(B, tm_o)
    if B_pad != B:
        h = jnp.zeros((B_pad, K_out), h.dtype).at[:B].set(h)
    tk = 512 if K_out % 512 == 0 else (256 if K_out % 256 == 0 else 128)

    out = out_linear(h, packed["out_w"], packed["out_b"], tm=tm_o, tk=tk)  # (B_pad, label_pad) f32
    return out[:B, :label]


# ---------------------------------------------------------------------------
# Reference (plain JAX) with matching bf16 matmul-input casts.
# ---------------------------------------------------------------------------
def ffnn_reference(params, inputs, compute_dtype=COMPUTE_DTYPE):
    v, _adj = inputs
    B, N, F = v.shape
    x = v.reshape(B * N, F)
    for w, b in params["hidden"]:
        y = jnp.dot(x.astype(compute_dtype), w.astype(compute_dtype),
                    preferred_element_type=jnp.float32)
        x = jnp.maximum(y + b.astype(jnp.float32), 0.0)
    H = x.shape[-1]
    x = x.reshape(B, N * H)
    w_out, b_out = params["out"]
    y = jnp.dot(x.astype(compute_dtype), w_out.astype(compute_dtype),
                preferred_element_type=jnp.float32)
    return y + b_out.astype(jnp.float32)


if __name__ == "__main__":
    # Small shapes consistent with the module.
    batch = 2
    nb_nodes = 8
    feats = 16
    hidden = [32, 32]
    label = 4

    key = jax.random.PRNGKey(0)
    kv, ka, kp = jax.random.split(key, 3)
    v = jax.random.normal(kv, (batch, nb_nodes, feats), jnp.float32)
    adj = jax.random.normal(ka, (batch, nb_nodes, nb_nodes), jnp.float32)  # unused

    params = init_ffnn_params(kp, feats, hidden, label, nb_nodes)
    packed = pack_ffnn_params(params, nb_nodes)

    out = ffnn_forward(packed, (v, adj))
    out = jax.block_until_ready(out)
    assert out.shape == (batch, label), out.shape

    ref = ffnn_reference(params, (v, adj))
    assert jnp.allclose(out, ref, atol=1e-2, rtol=1e-2), (
        float(jnp.max(jnp.abs(out - ref))))

    print("KERNEL_OK")
</pallas_src>

<mosaic_0001>
module attributes {stable_mosaic.version = 11 : i64} {
  func.func @_hidden_stack_kernel(%arg0: i32, %arg1: memref<16x128xbf16, #tpu.memory_space<vmem>>, %arg2: memref<128x128xbf16, #tpu.memory_space<vmem>>, %arg3: memref<1x128xf32, #tpu.memory_space<vmem>>, %arg4: memref<128x128xbf16, #tpu.memory_space<vmem>>, %arg5: memref<1x128xf32, #tpu.memory_space<vmem>>, %arg6: memref<16x128xbf16, #tpu.memory_space<vmem>>) attributes {dimension_semantics = [#tpu.dimension_semantics<parallel>], iteration_bounds = array<i64: 1>, scalar_prefetch = 0 : i64, scratch_operands = 0 : i64, tpu.core_type = #tpu.core_type<tc>, window_params = [{transform_indices = @transform_0, window_bounds = array<i64: 16, 128>}, {pipeline_mode = #tpu.pipeline_mode<synchronous>, transform_indices = @transform_1, window_bounds = array<i64: 128, 128>}, {pipeline_mode = #tpu.pipeline_mode<synchronous>, transform_indices = @transform_2, window_bounds = array<i64: 1, 128>}, {pipeline_mode = #tpu.pipeline_mode<synchronous>, transform_indices = @transform_3, window_bounds = array<i64: 128, 128>}, {pipeline_mode = #tpu.pipeline_mode<synchronous>, transform_indices = @transform_4, window_bounds = array<i64: 1, 128>}, {transform_indices = @transform_5, window_bounds = array<i64: 16, 128>}]} {
    %c0 = arith.constant 0 : index
    %c0_0 = arith.constant 0 : index
    %0 = vector.load %arg1[%c0, %c0_0] : memref<16x128xbf16, #tpu.memory_space<vmem>>, vector<16x128xbf16>
    %c0_1 = arith.constant 0 : index
    %c0_2 = arith.constant 0 : index
    %1 = vector.load %arg2[%c0_1, %c0_2] : memref<128x128xbf16, #tpu.memory_space<vmem>>, vector<128x128xbf16>
    %cst = arith.constant dense<0.000000e+00> : vector<16x128xf32>
    %2 = tpu.matmul %0, %1, %cst {dimension_numbers = #tpu.dot_dimension_numbers<[1], [0], [0], [1], [0, 0, 1, 1], [], []>} : vector<16x128xbf16>, vector<128x128xbf16>, vector<16x128xf32> -> vector<16x128xf32>
    %c0_3 = arith.constant 0 : index
    %c0_4 = arith.constant 0 : index
    %3 = vector.load %arg3[%c0_3, %c0_4] : memref<1x128xf32, #tpu.memory_space<vmem>>, vector<1x128xf32>
    %4 = vector.broadcast %3 : vector<1x128xf32> to vector<16x128xf32>
    %5 = arith.addf %2, %4 : vector<16x128xf32>
    %cst_5 = arith.constant 0.000000e+00 : f32
    %6 = vector.broadcast %cst_5 : f32 to vector<16x128xf32>
    %7 = arith.maximumf %5, %6 : vector<16x128xf32>
    %8 = arith.truncf %7 : vector<16x128xf32> to vector<16x128xbf16>
    %c0_6 = arith.constant 0 : index
    %c0_7 = arith.constant 0 : index
    %9 = vector.load %arg4[%c0_6, %c0_7] : memref<128x128xbf16, #tpu.memory_space<vmem>>, vector<128x128xbf16>
    %cst_8 = arith.constant dense<0.000000e+00> : vector<16x128xf32>
    %10 = tpu.matmul %8, %9, %cst_8 {dimension_numbers = #tpu.dot_dimension_numbers<[1], [0], [0], [1], [0, 0, 1, 1], [], []>} : vector<16x128xbf16>, vector<128x128xbf16>, vector<16x128xf32> -> vector<16x128xf32>
    %c0_9 = arith.constant 0 : index
    %c0_10 = arith.constant 0 : index
    %11 = vector.load %arg5[%c0_9, %c0_10] : memref<1x128xf32, #tpu.memory_space<vmem>>, vector<1x128xf32>
    %12 = vector.broadcast %11 : vector<1x128xf32> to vector<16x128xf32>
    %13 = arith.addf %10, %12 : vector<16x128xf32>
    %cst_11 = arith.constant 0.000000e+00 : f32
    %14 = vector.broadcast %cst_11 : f32 to vector<16x128xf32>
    %15 = arith.maximumf %13, %14 : vector<16x128xf32>
    %16 = arith.truncf %15 : vector<16x128xf32> to vector<16x128xbf16>
    %c0_12 = arith.constant 0 : index
    %c0_13 = arith.constant 0 : index
    %17 = vector.load %arg6[%c0_12, %c0_13] : memref<16x128xbf16, #tpu.memory_space<vmem>>, vector<16x128xbf16>
    tpu.vector_store %arg6[%c0_12, %c0_13], %16 {strides = array<i32>} : memref<16x128xbf16, #tpu.memory_space<vmem>>, vector<16x128xbf16>,
    return
  }
  func.func @transform_0(%arg0: i32) -> (i32, i32) {
    %c0_i32 = arith.constant 0 : i32
    %c0_i32_0 = arith.constant 0 : i32
    return %arg0, %c0_i32 : i32, i32
  }
  func.func @transform_1(%arg0: i32) -> (i32, i32) {
    %c0_i32 = arith.constant 0 : i32
    %c0_i32_0 = arith.constant 0 : i32
    %c0_i32_1 = arith.constant 0 : i32
    return %c0_i32, %c0_i32_0 : i32, i32
  }
  func.func @transform_2(%arg0: i32) -> (i32, i32) {
    %c0_i32 = arith.constant 0 : i32
    %c0_i32_0 = arith.constant 0 : i32
    %c0_i32_1 = arith.constant 0 : i32
    return %c0_i32, %c0_i32_0 : i32, i32
  }
  func.func @transform_3(%arg0: i32) -> (i32, i32) {
    %c0_i32 = arith.constant 0 : i32
    %c0_i32_0 = arith.constant 0 : i32
    %c0_i32_1 = arith.constant 0 : i32
    return %c0_i32, %c0_i32_0 : i32, i32
  }
  func.func @transform_4(%arg0: i32) -> (i32, i32) {
    %c0_i32 = arith.constant 0 : i32
    %c0_i32_0 = arith.constant 0 : i32
    %c0_i32_1 = arith.constant 0 : i32
    return %c0_i32, %c0_i32_0 : i32, i32
  }
  func.func @transform_5(%arg0: i32) -> (i32, i32) {
    %c0_i32 = arith.constant 0 : i32
    %c0_i32_0 = arith.constant 0 : i32
    return %arg0, %c0_i32 : i32, i32
  }
}

</mosaic_0001>

<llo_original>
// kernel: tpu_custom_call.1
$region0: #{tpu_custom_call.1}
  #allocation0 [shape = 'u32[]', space=smem, size = 0x4, offset = 0x4, fixed_abs, tag = 'smem constant byte address 0x4 - core index']
  #allocation1 [shape = 'u32[144,128]{1,0:T(1,128)}', space=vmem, size = 0x12000, scoped, tag = 'internal scratch']
  %s0 = inlined_call_operand.hbm [shape: bf16[16,128], index: 0, kind: input, shape index: {}]
  %s1 = inlined_call_operand.hbm [shape: bf16[128,128], index: 1, kind: input, shape index: {}]
  %s2 = inlined_call_operand.vmem [shape: f32[1,128], index: 2, kind: input, shape index: {}]
  %s3 = inlined_call_operand.hbm [shape: bf16[128,128], index: 3, kind: input, shape index: {}]
  %s4 = inlined_call_operand.vmem [shape: f32[1,128], index: 4, kind: input, shape index: {}]
  %s5 = inlined_call_operand.hbm [shape: bf16[16,128], index: 5, kind: output, shape index: {}]
  %s6 = sld [smem:[#allocation0]]
  $region42: #{tpu_custom_call.1} parent=0
    _
  %s8 = ssub.s32 1, %s6
  %s9 = scalar_select 0, %s8, %s6
  $region1: #{tpu_custom_call.1} parent=0
    #allocation2 [shape = 'u8[4096]{0}', space=vmem, size = 0x1000, scoped, tag = 'input window, operand 0, single buffered']
    #allocation3 [shape = 's32[1]{0}', space=sflag, size = 0x4, scoped, tag = 'scoped memory for tpu_custom_call.1']
    #allocation4 [shape = 's32[1]{0}', space=sflag, size = 0x4, scoped, tag = 'scoped memory for tpu_custom_call.1']
    #allocation5 [shape = 'u8[32768]{0}', space=vmem, size = 0x8000, scoped, tag = 'input window, operand 1, single buffered']
    #allocation6 [shape = 's32[1]{0}', space=sflag, size = 0x4, scoped, tag = 'scoped memory for tpu_custom_call.1']
    #allocation7 [shape = 'u8[32768]{0}', space=vmem, size = 0x8000, scoped, tag = 'input window, operand 3, single buffered']
    #allocation8 [shape = 'u8[4096]{0}', space=vmem, size = 0x1000, scoped, tag = 'output window, operand 0, single buffered']
    %10 = vsyncpa [#allocation3], 0
    %11 = vsyncpa [#allocation6], 0
    %12 = vsyncpa [#allocation4], 0
    // Predicated region
    $region2: #{tpu_custom_call.1} parent=1 // pred_check
      _
    $region3: #{tpu_custom_call.1} parent=1 // pred_check_branch
      %14 = sbr.rel (0) target = $region5
    $region4: #{tpu_custom_call.1} parent=1 // pred_region
      %s16 = ssub.s32 128, 128
      %17 = vsyncadd [#allocation3], %s16
      %s18 = sshll.u32 [#allocation2], 4
      %s19 = int_to_ptr.vmem [resolvable:$true] %s18
      %24 = dma.hbm_to_vmem [thread:$0]  %s0, 128, %s19, [#allocation3], 64, 64, 4
    $region5: #{tpu_custom_call.1} parent=1 // pred_fallthru
      _
    // Predicated region
    $region6: #{tpu_custom_call.1} parent=1 // pred_check
      _
    $region7: #{tpu_custom_call.1} parent=1 // pred_check_branch
      %26 = sbr.rel (0) target = $region9
    $region8: #{tpu_custom_call.1} parent=1 // pred_region
      %s28 = ssub.s32 1024, 1024
      %29 = vsyncadd [#allocation6], %s28
      %s30 = sshll.u32 [#allocation5], 4
      %s31 = int_to_ptr.vmem [resolvable:$true] %s30
      %36 = dma.hbm_to_vmem [thread:$0]  %s1, 1024, %s31, [#allocation6], 64, 64, 4
    $region9: #{tpu_custom_call.1} parent=1 // pred_fallthru
      _
    // Predicated region
    $region10: #{tpu_custom_call.1} parent=1 // pred_check
      _
    $region11: #{tpu_custom_call.1} parent=1 // pred_check_branch
      %38 = sbr.rel (0) target = $region13
    $region12: #{tpu_custom_call.1} parent=1 // pred_region
      _
    $region13: #{tpu_custom_call.1} parent=1 // pred_fallthru
      _
    // Predicated region
    $region14: #{tpu_custom_call.1} parent=1 // pred_check
      _
    $region15: #{tpu_custom_call.1} parent=1 // pred_check_branch
      %40 = sbr.rel (0) target = $region17
    $region16: #{tpu_custom_call.1} parent=1 // pred_region
      %s42 = ssub.s32 1024, 1024
      %43 = vsyncadd [#allocation6], %s42
      %s44 = sshll.u32 [#allocation7], 4
      %s45 = int_to_ptr.vmem [resolvable:$true] %s44
      %50 = dma.hbm_to_vmem [thread:$0]  %s3, 1024, %s45, [#allocation6], 64, 64, 4
    $region17: #{tpu_custom_call.1} parent=1 // pred_fallthru
      _
    // Predicated region
    $region18: #{tpu_custom_call.1} parent=1 // pred_check
      _
    $region19: #{tpu_custom_call.1} parent=1 // pred_check_branch
      %52 = sbr.rel (0) target = $region21
    $region20: #{tpu_custom_call.1} parent=1 // pred_region
      _
    $region21: #{tpu_custom_call.1} parent=1 // pred_fallthru
      _
    // Predicated region
    $region22: #{tpu_custom_call.1} parent=1 // pred_check
      _
    $region23: #{tpu_custom_call.1} parent=1 // pred_check_branch
      %54 = sbr.rel (0) target = $region25
    $region24: #{tpu_custom_call.1} parent=1 // pred_region
      %55 = dma.done [#allocation3], 128
    $region25: #{tpu_custom_call.1} parent=1 // pred_fallthru
      _
    // Predicated region
    $region26: #{tpu_custom_call.1} parent=1 // pred_check
      _
    $region27: #{tpu_custom_call.1} parent=1 // pred_check_branch
      %57 = sbr.rel (0) target = $region29
    $region28: #{tpu_custom_call.1} parent=1 // pred_region
      %58 = dma.done [#allocation6], 1024
    $region29: #{tpu_custom_call.1} parent=1 // pred_fallthru
      _
    // Predicated region
    $region30: #{tpu_custom_call.1} parent=1 // pred_check
      _
    $region31: #{tpu_custom_call.1} parent=1 // pred_check_branch
      %60 = sbr.rel (0) target = $region33
    $region32: #{tpu_custom_call.1} parent=1 // pred_region
      %61 = dma.done [#allocation6], 1024
    $region33: #{tpu_custom_call.1} parent=1 // pred_fallthru
      _
    %v63 = vld [vmem:[#allocation2] sm:$0xf]
    %v64 = vld [vmem:[#allocation2 + $0x4] sm:$0xf]
    %v65 = vld [vmem:[#allocation5] sm:$0xf]
    %v66 = vld [vmem:[#allocation5 + $0x4] sm:$0xf]
    %v67 = vld [vmem:[#allocation5 + $0x8] sm:$0xf]
    %v68 = vld [vmem:[#allocation5 + $0xc] sm:$0xf]
    %v69 = vld [vmem:[#allocation5 + $0x10] sm:$0xf]
    %v70 = vld [vmem:[#allocation5 + $0x14] sm:$0xf]
    %v71 = vld [vmem:[#allocation5 + $0x18] sm:$0xf]
    %v72 = vld [vmem:[#allocation5 + $0x1c] sm:$0xf]
    %v73 = vld [vmem:[#allocation5 + $0x20] sm:$0xf]
    %v74 = vld [vmem:[#allocation5 + $0x24] sm:$0xf]
    %v75 = vld [vmem:[#allocation5 + $0x28] sm:$0xf]
    %v76 = vld [vmem:[#allocation5 + $0x2c] sm:$0xf]
    %v77 = vld [vmem:[#allocation5 + $0x30] sm:$0xf]
    %v78 = vld [vmem:[#allocation5 + $0x34] sm:$0xf]
    %v79 = vld [vmem:[#allocation5 + $0x38] sm:$0xf]
    %v80 = vld [vmem:[#allocation5 + $0x3c] sm:$0xf]
    %v81 = vld [vmem:[%s2] sm:$0x1]
    %v83 = vlaneseq
    %v84 = vshrl.u32 %v83, 7
    %v85 = vsub.s32 0, %v84
    %v86 = vrot.slane %v81, %v85
    %v90 = vunpack.c.l.b16 %v63
    %v91 = vunpack.c.l.b16 %v64
    %v92 = vpack.c.b16 %v91, %v90
    %v110 = vunpack.c.l.b16 %v65
    %v111 = vunpack.c.l.b16 %v66
    %v112 = vunpack.c.l.b16 %v67
    %v113 = vunpack.c.l.b16 %v68
    %v114 = vunpack.c.l.b16 %v69
    %v115 = vunpack.c.l.b16 %v70
    %v116 = vunpack.c.l.b16 %v71
    %v117 = vunpack.c.l.b16 %v72
    %v118 = vunpack.c.l.b16 %v73
    %v119 = vunpack.c.l.b16 %v74
    %v120 = vunpack.c.l.b16 %v75
    %v121 = vunpack.c.l.b16 %v76
    %v122 = vunpack.c.l.b16 %v77
    %v123 = vunpack.c.l.b16 %v78
    %v124 = vunpack.c.l.b16 %v79
    %v125 = vunpack.c.l.b16 %v80
    %v126 = vpack.c.b16 %v111, %v110
    %v127 = vpack.c.b16 %v113, %v112
    %v128 = vpack.c.b16 %v115, %v114
    %v129 = vpack.c.b16 %v117, %v116
    %v130 = vpack.c.b16 %v119, %v118
    %v131 = vpack.c.b16 %v121, %v120
    %v132 = vpack.c.b16 %v123, %v122
    %v133 = vpack.c.b16 %v125, %v124
    %142 = vmatprep.subr.bf16.mxu0 0
    %143 = vmatpush1.bf16.msra.mxu0 %v126
    %144 = vmatprep.subr.bf16.mxu0 0
    %145 = vmatpush1.bf16.msra.mxu0 %v127
    %146 = vmatprep.subr.bf16.mxu0 0
    %147 = vmatpush1.bf16.msra.mxu0 %v128
    %148 = vmatprep.subr.bf16.mxu0 0
    %149 = vmatpush1.bf16.msra.mxu0 %v129
    %150 = vmatprep.subr.bf16.mxu0 0
    %151 = vmatpush1.bf16.msra.mxu0 %v130
    %152 = vmatprep.subr.bf16.mxu0 0
    %153 = vmatpush1.bf16.msra.mxu0 %v131
    %154 = vmatprep.subr.bf16.mxu0 0
    %155 = vmatpush1.bf16.msra.mxu0 %v132
    %156 = vmatprep.subr.bf16.mxu0 0
    %157 = vmatpush1.bf16.msra.mxu0 %v133
    %158 = vmatprep.subr.bf16.mxu0 0
    %159 = vmatpush1.bf16.msra.mxu0 0
    %160 = vmatprep.subr.bf16.mxu0 0
    %161 = vmatpush1.bf16.msra.mxu0 0
    %162 = vmatprep.subr.bf16.mxu0 0
    %163 = vmatpush1.bf16.msra.mxu0 0
    %164 = vmatprep.subr.bf16.mxu0 0
    %165 = vmatpush1.bf16.msra.mxu0 0
    %166 = vmatprep.subr.bf16.mxu0 0
    %167 = vmatpush1.bf16.msra.mxu0 0
    %168 = vmatprep.subr.bf16.mxu0 0
    %169 = vmatpush1.bf16.msra.mxu0 0
    %170 = vmatprep.subr.bf16.mxu0 0
    %171 = vmatpush1.bf16.msra.mxu0 0
    %172 = vmatprep.subr.bf16.mxu0 0
    %173 = vmatpush1.bf16.msra.mxu0 0
    %174 = vmatprep.mubr.bf16.mxu0 0
    %175 = vmatmul.mubr.bf16.gmra.mrb[0].mxu0 %v92
    %v176 = vpop.f32.mrb[0].mxu0
    %v177 = vadd.f32 %v86, %v176
    %v178 = vpop.f32.mrb[0].mxu0
    %v179 = vpop.f32.mrb[0].mxu0
    %v180 = vadd.f32 %v86, %v179
    %v181 = vpop.f32.mrb[0].mxu0
    %182 = vdwg.mxu0
    %v183 = vmax.f32 %v177, 0.0
    %v184 = vmax.f32 %v180, 0.0
    %v185 = vpack.c.bf16 %v184, %v183
    %v186 = vld [vmem:[#allocation7] sm:$0xf]
    %v187 = vld [vmem:[#allocation7 + $0x4] sm:$0xf]
    %v188 = vld [vmem:[#allocation7 + $0x8] sm:$0xf]
    %v189 = vld [vmem:[#allocation7 + $0xc] sm:$0xf]
    %v190 = vld [vmem:[#allocation7 + $0x10] sm:$0xf]
    %v191 = vld [vmem:[#allocation7 + $0x14] sm:$0xf]
    %v192 = vld [vmem:[#allocation7 + $0x18] sm:$0xf]
    %v193 = vld [vmem:[#allocation7 + $0x1c] sm:$0xf]
    %v194 = vld [vmem:[#allocation7 + $0x20] sm:$0xf]
    %v195 = vld [vmem:[#allocation7 + $0x24] sm:$0xf]
    %v196 = vld [vmem:[#allocation7 + $0x28] sm:$0xf]
    %v197 = vld [vmem:[#allocation7 + $0x2c] sm:$0xf]
    %v198 = vld [vmem:[#allocation7 + $0x30] sm:$0xf]
    %v199 = vld [vmem:[#allocation7 + $0x34] sm:$0xf]
    %v200 = vld [vmem:[#allocation7 + $0x38] sm:$0xf]
    %v201 = vld [vmem:[#allocation7 + $0x3c] sm:$0xf]
    %v202 = vld [vmem:[%s4] sm:$0x1]
    %v204 = vlaneseq
    %v205 = vshrl.u32 %v204, 7
    %v206 = vsub.s32 0, %v205
    %v207 = vrot.slane %v202, %v206
    %v225 = vunpack.c.l.b16 %v186
    %v226 = vunpack.c.l.b16 %v187
    %v227 = vunpack.c.l.b16 %v188
    %v228 = vunpack.c.l.b16 %v189
    %v229 = vunpack.c.l.b16 %v190
    %v230 = vunpack.c.l.b16 %v191
    %v231 = vunpack.c.l.b16 %v192
    %v232 = vunpack.c.l.b16 %v193
    %v233 = vunpack.c.l.b16 %v194
    %v234 = vunpack.c.l.b16 %v195
    %v235 = vunpack.c.l.b16 %v196
    %v236 = vunpack.c.l.b16 %v197
    %v237 = vunpack.c.l.b16 %v198
    %v238 = vunpack.c.l.b16 %v199
    %v239 = vunpack.c.l.b16 %v200
    %v240 = vunpack.c.l.b16 %v201
    %v241 = vpack.c.b16 %v226, %v225
    %v242 = vpack.c.b16 %v228, %v227
    %v243 = vpack.c.b16 %v230, %v229
    %v244 = vpack.c.b16 %v232, %v231
    %v245 = vpack.c.b16 %v234, %v233
    %v246 = vpack.c.b16 %v236, %v235
    %v247 = vpack.c.b16 %v238, %v237
    %v248 = vpack.c.b16 %v240, %v239
    %257 = vmatprep.subr.bf16.mxu0 0
    %258 = vmatpush1.bf16.msra.mxu0 %v241
    %259 = vmatprep.subr.bf16.mxu0 0
    %260 = vmatpush1.bf16.msra.mxu0 %v242
    %261 = vmatprep.subr.bf16.mxu0 0
    %262 = vmatpush1.bf16.msra.mxu0 %v243
    %263 = vmatprep.subr.bf16.mxu0 0
    %264 = vmatpush1.bf16.msra.mxu0 %v244
    %265 = vmatprep.subr.bf16.mxu0 0
    %266 = vmatpush1.bf16.msra.mxu0 %v245
    %267 = vmatprep.subr.bf16.mxu0 0
    %268 = vmatpush1.bf16.msra.mxu0 %v246
    %269 = vmatprep.subr.bf16.mxu0 0
    %270 = vmatpush1.bf16.msra.mxu0 %v247
    %271 = vmatprep.subr.bf16.mxu0 0
    %272 = vmatpush1.bf16.msra.mxu0 %v248
    %273 = vmatprep.subr.bf16.mxu0 0
    %274 = vmatpush1.bf16.msra.mxu0 0
    %275 = vmatprep.subr.bf16.mxu0 0
    %276 = vmatpush1.bf16.msra.mxu0 0
    %277 = vmatprep.subr.bf16.mxu0 0
    %278 = vmatpush1.bf16.msra.mxu0 0
    %279 = vmatprep.subr.bf16.mxu0 0
    %280 = vmatpush1.bf16.msra.mxu0 0
    %281 = vmatprep.subr.bf16.mxu0 0
    %282 = vmatpush1.bf16.msra.mxu0 0
    %283 = vmatprep.subr.bf16.mxu0 0
    %284 = vmatpush1.bf16.msra.mxu0 0
    %285 = vmatprep.subr.bf16.mxu0 0
    %286 = vmatpush1.bf16.msra.mxu0 0
    %287 = vmatprep.subr.bf16.mxu0 0
    %288 = vmatpush1.bf16.msra.mxu0 0
    %289 = vmatprep.mubr.bf16.mxu0 0
    %290 = vmatmul.mubr.bf16.gmra.mrb[0].mxu0 %v185
    %v291 = vpop.f32.mrb[0].mxu0
    %v292 = vadd.f32 %v207, %v291
    %v293 = vpop.f32.mrb[0].mxu0
    %v294 = vpop.f32.mrb[0].mxu0
    %v295 = vadd.f32 %v207, %v294
    %v296 = vpop.f32.mrb[0].mxu0
    %297 = vdwg.mxu0
    %v298 = vmax.f32 %v292, 0.0
    %v299 = vmax.f32 %v295, 0.0
    %v300 = vpack.c.bf16 %v299, %v298
    %v302 = vunpack.c.l.b16 %v300
    %v303 = vunpack.c.h.b16 %v300
    %v304 = vpack.c.b16 %v302, %v302
    %v305 = vpack.c.b16 %v303, %v303
    %308 = vst [vmem:[#allocation8] sm:$0xf] %v304
    %309 = vst [vmem:[#allocation8 + $0x4] sm:$0xf] %v305
    // Predicated region
    $region34: #{tpu_custom_call.1} parent=1 // pred_check
      _
    $region35: #{tpu_custom_call.1} parent=1 // pred_check_branch
      %311 = sbr.rel (0) target = $region37
    $region36: #{tpu_custom_call.1} parent=1 // pred_region
      %s313 = ssub.s32 128, 128
      %314 = vsyncadd [#allocation4], %s313
      %s315 = sshll.u32 [#allocation8], 4
      %s316 = int_to_ptr.vmem [resolvable:$true] %s315
      %321 = dma.vmem_to_hbm [thread:$0]  %s316, 128, %s5, [#allocation4], 64, 64, 4
    $region37: #{tpu_custom_call.1} parent=1 // pred_fallthru
      _
    // Predicated region
    $region38: #{tpu_custom_call.1} parent=1 // pred_check
      _
    $region39: #{tpu_custom_call.1} parent=1 // pred_check_branch
      %323 = sbr.rel (0) target = $region41
    $region40: #{tpu_custom_call.1} parent=1 // pred_region
      %324 = dma.done [#allocation4], 128
    $region41: #{tpu_custom_call.1} parent=1 // pred_fallthru
      _
    %325 = vsyncpa [#allocation3], 1
    %326 = vsyncpa [#allocation6], 1
    %327 = vsyncpa [#allocation4], 1

</llo_original>
